<compile_context>
chip_gen: v5e
topology: v5e:2x2
jax: 0.10.0
libtpu: 0.0.40
codegen_flags: <defaults>
</compile_context>

<pallas_src>
import math

import jax
import jax.numpy as jnp
from jax.experimental import pallas as pl
from jax.experimental.pallas import tpu as pltpu


def constant_input_kernel(const_ref, out_ref):
    # const_ref: (1, lt) VMEM tile of the (packed) flattened constant.
    # out_ref:   (bt, lt) VMEM tile of the output.
    # Sublane broadcast (1 -> bt); stores are lane-dense (lt % 128 == 0 or
    # lt == full width), so writeback is unmasked vst + dense DMA.
    out_ref[...] = jnp.broadcast_to(const_ref[...], out_ref.shape)


def _tpu_generation_params():
    """(tile_budget_bytes, prefer_multi_step) for the local TPU generation."""
    kind = ""
    try:
        kind = getattr(jax.devices()[0], "device_kind", "") or ""
    except Exception:
        pass
    k = kind.lower().replace(" ", "")
    if "v5lite" in k or "v5e" in k:
        return 4 << 20, False           # v5e: 16 MiB default scoped VMEM, 1 TC
    if "v6" in k:
        return 8 << 20, False           # v6e: plenty of VMEM, 1 TC
    if "7" in k:
        return 12 << 20, True           # v7x: 64 MiB physical VMEM, 2 TCs/chip
    return 4 << 20, False               # unknown generation: conservative


def _pick_packing(batch, f):
    """Pick k so L = k*f is a multiple of 128 (lane-dense rows) and k divides
    the batch. Falls back to k=1 (original layout) when impossible."""
    k0 = 128 // math.gcd(f, 128)
    if batch % k0 != 0:
        return 1                         # fallback: possibly masked stores
    k = k0
    # Widen toward 512-1024 lanes when the batch allows (helps tiny F).
    while batch % (2 * k) == 0 and 2 * k * f <= 1024:
        k *= 2
    return k


def _pick_tiles(rows, lanes, elt, target_bytes, prefer_multi_step):
    """Choose (bt, lt) block shape for a (rows, lanes) lane-dense output.

    Mosaic constraint: bt % 8 == 0 or bt == rows; lt % 128 == 0 or lt == lanes.
    The block is clamped in bytes so 2*(bt*lt) + const fits the scoped VMEM
    budget on every generation.
    """
    row_bytes = lanes * elt
    total_bytes = rows * row_bytes

    # Lane-tile only when a single row blows the budget (keeps lt % 128 == 0).
    if row_bytes > target_bytes and lanes % 128 == 0 and lanes > 128:
        lt = max(128, (target_bytes // (8 * elt)) // 128 * 128)
        lt = min(lt, lanes)
    else:
        lt = lanes

    bt = max(1, target_bytes // (lt * elt))
    if prefer_multi_step and total_bytes > (4 << 20) and rows >= 2:
        # Keep >=2 row steps so the "parallel" axis spans both TensorCores.
        bt = min(bt, (rows + 1) // 2)

    if bt >= rows:
        bt = rows                        # full dim: always a legal block dim
    elif bt >= 8:
        bt = (bt // 8) * 8               # sublane-friendly multiple of 8
    else:
        # TODO(synk): pathologically huge non-128-multiple rows could overshoot
        # the byte budget here; does not occur for realistic ConstantInput F.
        bt = rows if rows <= 8 else 8
    return int(bt), int(lt)


def constant_input_forward(x, const):
    """Replicates `const` (1, C, S, S) across the batch dim of `x`.

    Only x.shape[0] (batch size) is used, matching the PyTorch module.
    """
    batch = x.shape[0]
    _, c, s1, s2 = const.shape
    f = c * s1 * s2
    dtype = const.dtype
    elt = jnp.dtype(dtype).itemsize

    # --- Lane-dense packing: k copies of the constant per output row. -------
    k = _pick_packing(batch, f)
    lanes = k * f                        # row width (multiple of 128 if k > 1
    rows = batch // k                    #  packing succeeded, else == F)

    const_flat = const.reshape(1, f)     # free row-major reshape
    const_packed = jnp.tile(const_flat, (1, k)) if k > 1 else const_flat

    # --- Generation-aware tiling + explicit VMEM budget. --------------------
    target_bytes, prefer_multi_step = _tpu_generation_params()
    bt, lt = _pick_tiles(rows, lanes, elt, target_bytes, prefer_multi_step)

    # 2x double-buffered output tile + 2x constant block + headroom.
    vmem_limit = 2 * bt * lt * elt + 2 * lt * elt + (2 << 20)
    vmem_limit = int(max(vmem_limit, 16 << 20))

    cost = pl.CostEstimate(
        flops=0,
        transcendentals=0,
        bytes_accessed=(rows * lanes + lanes) * elt,  # write B*F, read const
    )

    out_flat = pl.pallas_call(
        constant_input_kernel,
        out_shape=jax.ShapeDtypeStruct((rows, lanes), dtype),
        grid_spec=pltpu.PrefetchScalarGridSpec(
            num_scalar_prefetch=0,
            grid=(pl.cdiv(rows, bt), pl.cdiv(lanes, lt)),
            in_specs=[
                # Same constant lane-slice for every row tile.
                pl.BlockSpec((1, lt), lambda i, j: (0, j)),
            ],
            out_specs=pl.BlockSpec((bt, lt), lambda i, j: (i, j)),
        ),
        compiler_params=pltpu.CompilerParams(
            dimension_semantics=("parallel", "parallel"),
            vmem_limit_bytes=vmem_limit,
        ),
        cost_estimate=cost,
    )(const_packed)

    # Each output row is k consecutive copies of the constant, so the
    # row-major reshape back to NCHW is exactly torch's repeat(batch, 1, 1, 1).
    return out_flat.reshape(batch, c, s1, s2)


if __name__ == "__main__":
    key = jax.random.PRNGKey(0)
    k_param, k_x = jax.random.split(key)

    channel = 4
    size = 4
    batch = 2

    # Deterministic parameter init (equivalent of torch.randn(1, C, S, S)).
    const_param = jax.random.normal(
        k_param, (1, channel, size, size), dtype=jnp.float32
    )

    # The forward only uses input.shape[0]; the rest of x is arbitrary.
    x = jax.random.normal(k_x, (batch, channel, 16, 16), dtype=jnp.float32)

    out = constant_input_forward(x, const_param)
    out = jax.block_until_ready(out)

    # Correctness check against plain-JAX reference (torch .repeat semantics).
    ref = jnp.broadcast_to(const_param, (batch, channel, size, size))
    assert out.shape == (batch, channel, size, size), out.shape
    assert jnp.allclose(out, ref), "mismatch vs reference broadcast"

    print("KERNEL_OK")
</pallas_src>

<mosaic_0001>
module attributes {stable_mosaic.version = 11 : i64} {
  func.func @constant_input_kernel(%arg0: i32, %arg1: i32, %arg2: memref<1x128xf32, #tpu.memory_space<vmem>>, %arg3: memref<1x128xf32, #tpu.memory_space<vmem>>) attributes {dimension_semantics = [#tpu.dimension_semantics<parallel>, #tpu.dimension_semantics<parallel>], iteration_bounds = array<i64: 1, 1>, scalar_prefetch = 0 : i64, scratch_operands = 0 : i64, tpu.core_type = #tpu.core_type<tc>, window_params = [{transform_indices = @transform_0, window_bounds = array<i64: 1, 128>}, {transform_indices = @transform_1, window_bounds = array<i64: 1, 128>}]} {
    %c0 = arith.constant 0 : index
    %c0_0 = arith.constant 0 : index
    %0 = vector.load %arg2[%c0, %c0_0] : memref<1x128xf32, #tpu.memory_space<vmem>>, vector<1x128xf32>
    %c0_1 = arith.constant 0 : index
    %c0_2 = arith.constant 0 : index
    %1 = vector.load %arg3[%c0_1, %c0_2] : memref<1x128xf32, #tpu.memory_space<vmem>>, vector<1x128xf32>
    tpu.vector_store %arg3[%c0_1, %c0_2], %0 {strides = array<i32>} : memref<1x128xf32, #tpu.memory_space<vmem>>, vector<1x128xf32>,
    return
  }
  func.func @transform_0(%arg0: i32, %arg1: i32) -> (i32, i32) {
    %c0_i32 = arith.constant 0 : i32
    %c0_i32_0 = arith.constant 0 : i32
    return %c0_i32, %arg1 : i32, i32
  }
  func.func @transform_1(%arg0: i32, %arg1: i32) -> (i32, i32) {
    %c0_i32 = arith.constant 0 : i32
    return %arg0, %arg1 : i32, i32
  }
}

</mosaic_0001>

<llo_original>
// kernel: tpu_custom_call.1
$region0: #{tpu_custom_call.1}
  #allocation0 [shape = 'u32[]', space=smem, size = 0x4, offset = 0x4, fixed_abs, tag = 'smem constant byte address 0x4 - core index']
  #allocation1 [shape = 'u32[72,128]{1,0:T(1,128)}', space=vmem, size = 0x9000, scoped, tag = 'internal scratch']
  %s0 = inlined_call_operand.hbm [shape: f32[1,128], index: 0, kind: input, shape index: {}]
  %s1 = inlined_call_operand.hbm [shape: f32[1,128], index: 1, kind: output, shape index: {}]
  %s2 = sld [smem:[#allocation0]]
  $region18: #{tpu_custom_call.1} parent=0
    _
  %s4 = ssub.s32 1, %s2
  %s5 = scalar_select 0, %s4, %s2
  $region1: #{tpu_custom_call.1} parent=0
    #allocation2 [shape = 'u8[512]{0}', space=vmem, size = 0x400, scoped, tag = 'input window, operand 0, single buffered']
    #allocation3 [shape = 's32[1]{0}', space=sflag, size = 0x4, scoped, tag = 'scoped memory for tpu_custom_call.1']
    #allocation4 [shape = 's32[1]{0}', space=sflag, size = 0x4, scoped, tag = 'scoped memory for tpu_custom_call.1']
    #allocation5 [shape = 'u8[512]{0}', space=vmem, size = 0x400, scoped, tag = 'output window, operand 0, single buffered']
    %6 = vsyncpa [#allocation3], 0
    %7 = vsyncpa [#allocation4], 0
    // Predicated region
    $region2: #{tpu_custom_call.1} parent=1 // pred_check
      _
    $region3: #{tpu_custom_call.1} parent=1 // pred_check_branch
      %9 = sbr.rel (0) target = $region5
    $region4: #{tpu_custom_call.1} parent=1 // pred_region
      %11 = vsyncadd [#allocation3], 0
      %s13 = sshll.u32 %s0, 4
      %s14 = int_to_ptr.hbm [resolvable:$true] %s13
      %s15 = sshll.u32 [#allocation2], 4
      %s16 = int_to_ptr.vmem [resolvable:$true] %s15
      %18 = dma.hbm_to_vmem [thread:$0]  %s14, 16, %s16, [#allocation3]
    $region5: #{tpu_custom_call.1} parent=1 // pred_fallthru
      _
    // Predicated region
    $region6: #{tpu_custom_call.1} parent=1 // pred_check
      _
    $region7: #{tpu_custom_call.1} parent=1 // pred_check_branch
      %20 = sbr.rel (0) target = $region9
    $region8: #{tpu_custom_call.1} parent=1 // pred_region
      %22 = dma.done [#allocation3], 16
    $region9: #{tpu_custom_call.1} parent=1 // pred_fallthru
      _
    %v23 = vld [vmem:[#allocation2] sm:$0x1]
    %24 = vst [vmem:[#allocation5] sm:$0x1] %v23
    // Predicated region
    $region10: #{tpu_custom_call.1} parent=1 // pred_check
      _
    $region11: #{tpu_custom_call.1} parent=1 // pred_check_branch
      %26 = sbr.rel (0) target = $region13
    $region12: #{tpu_custom_call.1} parent=1 // pred_region
      %28 = vsyncadd [#allocation4], 0
      %s30 = sshll.u32 [#allocation5], 4
      %s31 = int_to_ptr.vmem [resolvable:$true] %s30
      %s32 = sshll.u32 %s1, 4
      %s33 = int_to_ptr.hbm [resolvable:$true] %s32
      %35 = dma.vmem_to_hbm [thread:$0]  %s31, 16, %s33, [#allocation4]
    $region13: #{tpu_custom_call.1} parent=1 // pred_fallthru
      _
    // Predicated region
    $region14: #{tpu_custom_call.1} parent=1 // pred_check
      _
    $region15: #{tpu_custom_call.1} parent=1 // pred_check_branch
      %37 = sbr.rel (0) target = $region17
    $region16: #{tpu_custom_call.1} parent=1 // pred_region
      %39 = dma.done [#allocation4], 16
    $region17: #{tpu_custom_call.1} parent=1 // pred_fallthru
      _
    %40 = vsyncpa [#allocation3], 1
    %41 = vsyncpa [#allocation4], 1

</llo_original>
